<compile_context>
chip_gen: v5e
topology: v5e:2x2
jax: 0.10.0
libtpu: 0.0.40
codegen_flags: <defaults>
</compile_context>

<pallas_src>
import jax
import jax.numpy as jnp
from jax.experimental import pallas as pl
from jax.experimental.pallas import tpu as pltpu

_LANE = 128


def _round_up(n, m):
    return -(-n // m) * m


# ----------------------------------------------------------------------------
# Pallas kernel: fused per-up-block 1x1-conv (channel matmul) + bias + SiLU,
# gridded over frames (NCHW layout preserved; no wrapper transposes).
# ----------------------------------------------------------------------------
def fused_conv1x1_silu(xs, wts, bs, num_frames):
    """Fused channel projections for all hooked up_blocks in one pallas_call.

    xs : list of (F, Cin, R_k) bf16 activations (R_k = lane-padded H*W).
    wts: list of (Cout_k, Cin) bf16 weights (already transposed: Y = Wt @ X).
    bs : list of (Cout_k,) f32 biases.
    Returns a list of (F, Cout_k, R_k) f32 arrays.
    """
    n = len(xs)
    assert len(wts) == n and len(bs) == n

    def kernel(*refs):
        in_refs, out_refs = refs[: 3 * n], refs[3 * n:]
        for k in range(n):                       # static unroll over up_blocks
            x_ref, w_ref, b_ref = in_refs[3 * k: 3 * k + 3]
            o_ref = out_refs[k]
            # bf16 x bf16 -> f32 accumulate on the MXU.
            y = jnp.dot(w_ref[...], x_ref[...],
                        preferred_element_type=jnp.float32)
            y = y + b_ref[...]                           # bias add in f32
            o_ref[...] = (y * jax.nn.sigmoid(y)).astype(o_ref.dtype)  # SiLU f32

    inputs, in_specs, out_specs, out_shapes = [], [], [], []
    flops = transcendentals = bytes_accessed = 0
    for x, w_t, b in zip(xs, wts, bs):
        f, cin, r = x.shape
        cout = w_t.shape[0]
        b2 = jnp.asarray(b, jnp.float32).reshape(cout, 1)
        inputs += [x, w_t, b2]
        in_specs += [
            # One frame per grid step; leading dim squeezed out of the ref.
            pl.BlockSpec((None, cin, r), lambda i: (i, 0, 0)),
            # Constant index_map -> weight/bias stay resident in VMEM across
            # the whole frame loop (no re-DMA per step).
            pl.BlockSpec((cout, cin), lambda i: (0, 0)),
            pl.BlockSpec((cout, 1), lambda i: (0, 0)),
        ]
        out_specs.append(pl.BlockSpec((None, cout, r), lambda i: (i, 0, 0)))
        out_shapes.append(jax.ShapeDtypeStruct((f, cout, r), jnp.float32))
        flops += 2 * cin * cout * r * f
        transcendentals += cout * r * f          # one sigmoid per output elem
        bytes_accessed += (x.size * x.dtype.itemsize
                           + w_t.size * w_t.dtype.itemsize
                           + b2.size * 4
                           + f * cout * r * 4)

    outs = pl.pallas_call(
        kernel,
        out_shape=tuple(out_shapes),
        grid_spec=pltpu.PrefetchScalarGridSpec(
            num_scalar_prefetch=0,
            grid=(num_frames,),
            in_specs=in_specs,
            out_specs=tuple(out_specs),
        ),
        compiler_params=pltpu.CompilerParams(
            # frames are independent -> shard across both v7x TensorCores;
            # harmless no-op on v5e/v6e (single TC).
            dimension_semantics=("parallel",),
            # explicit scoped-VMEM cap, safe on v7x (64 MiB physical).
            vmem_limit_bytes=32 * 1024 * 1024,
        ),
        cost_estimate=pl.CostEstimate(
            flops=flops,
            transcendentals=transcendentals,
            bytes_accessed=bytes_accessed,
        ),
    )(*inputs)
    return list(outs)


# ----------------------------------------------------------------------------
# reshape_tensor: exact semantics of torch .view on a contiguous NCHW tensor
# ----------------------------------------------------------------------------
def reshape_tensor(t):
    f, c, h, w = t.shape
    # Same raw row-major reinterpretation as torch.Tensor.view(1, c, h*f, w).
    return jnp.reshape(t, (1, c, h * f, w))


# ----------------------------------------------------------------------------
# SVDFeaturizer (synthetic): per hooked up_block, a Pallas-computed feature map
# ----------------------------------------------------------------------------
# Small, deterministic per-up-block configuration (spatial, Cin, Cout).
_BLOCK_CFG = {
    1: dict(hw=4, cin=8, cout=32),
    4: dict(hw=8, cin=8, cout=16),
    7: dict(hw=16, cin=8, cout=8),
}
_NUM_FRAMES = 4   # real pipeline uses num_frames=14; small for the demo


def _init_params(up_ft_index):
    """Deterministic synthetic weights for the per-block 1x1 projections."""
    params = {}
    base = jax.random.PRNGKey(42)
    for idx in up_ft_index:
        cfg = _BLOCK_CFG[idx]
        kw, kb = jax.random.split(jax.random.fold_in(base, idx))
        w = jax.random.normal(kw, (cfg["cin"], cfg["cout"]), jnp.float32)
        w = w * (1.0 / jnp.sqrt(cfg["cin"]))
        b = 0.01 * jax.random.normal(kb, (cfg["cout"],), jnp.float32)
        params[idx] = (w, b)
    return params


def _synthetic_latent(images, idx, num_frames):
    """Deterministic stand-in for the UNet up_block input at `idx`.

    TODO(synk): the real latent comes from VAE-encoding + UNet denoising of the
    resized conditioning images; here we derive it deterministically from the
    input images (resize + channel tiling + per-frame modulation).
    """
    cfg = _BLOCK_CFG[idx]
    hw, cin = cfg["hw"], cfg["cin"]
    img = jnp.mean(images, axis=0)                                  # (3, H, W)
    img = jax.image.resize(img, (3, hw, hw), method="linear")
    reps = -(-cin // 3)
    chan = jnp.tile(img, (reps, 1, 1))[:cin]                        # (cin,hw,hw)
    chan = chan + 0.01 * jnp.arange(cin, dtype=jnp.float32)[:, None, None]
    scale = 1.0 + 0.1 * jnp.arange(num_frames, dtype=jnp.float32)
    return scale[:, None, None, None] * chan[None]                  # (F,cin,hw,hw)


def svd_featurizer_forward(images, t=1, up_ft_index=(1, 4, 7),
                           num_frames=_NUM_FRAMES, params=None):
    """Returns a list of feature tensors, each of shape [1, C_i, H_i*F, W_i]."""
    if params is None:
        params = _init_params(up_ft_index)

    xs, wts, bs, metas = [], [], [], []
    for idx in up_ft_index:
        cfg = _BLOCK_CFG[idx]
        hw, cin, cout = cfg["hw"], cfg["cin"], cfg["cout"]
        lat = _synthetic_latent(images, idx, num_frames)    # (F,Cin,H,W) NCHW
        r = hw * hw
        rp = _round_up(r, _LANE)                            # lane-dense last dim
        # Free contiguous view (no transpose): (F,Cin,H,W) -> (F,Cin,H*W).
        x = lat.reshape(num_frames, cin, r)
        if rp != r:
            # Toy-size only: real SVD spatial (H*W >= 1024) needs no padding.
            x = jnp.pad(x, ((0, 0), (0, 0), (0, rp - r)))
        w, b = params[idx]
        xs.append(x.astype(jnp.bfloat16))                   # bf16 MXU inputs
        wts.append(w.T.astype(jnp.bfloat16))                # (Cout, Cin)
        bs.append(b)                                        # f32 bias
        metas.append((hw, cout, r))

    ys = fused_conv1x1_silu(xs, wts, bs, num_frames)        # Pallas hot path

    outputs = []
    for y3d, (hw, cout, r) in zip(ys, metas):
        y = y3d[..., :r].reshape(num_frames, cout, hw, hw)  # drop lane padding
        outputs.append(reshape_tensor(y))                   # [1, C, H*F, W]
    return outputs


if __name__ == "__main__":
    key = jax.random.PRNGKey(0)
    images = jax.random.uniform(key, (2, 3, 16, 16), jnp.float32)    # NCHW images

    params = _init_params((1, 4, 7))
    feats = svd_featurizer_forward(images, t=1, up_ft_index=(1, 4, 7),
                                   params=params)
    feats = [jax.block_until_ready(f) for f in feats]

    # Pure-JAX reference for the fused hot path (1x1 conv + bias + SiLU, f32).
    def ref_forward(images, up_ft_index, params, num_frames=_NUM_FRAMES):
        outs = []
        for idx in up_ft_index:
            lat = _synthetic_latent(images, idx, num_frames)         # (F,Cin,H,W)
            w, b = params[idx]
            y = jnp.einsum("fchw,co->fohw", lat, w) + b[None, :, None, None]
            y = y * jax.nn.sigmoid(y)
            outs.append(reshape_tensor(y))
        return outs

    refs = ref_forward(images, (1, 4, 7), params)

    expected = {
        1: (1, 32, 4 * _NUM_FRAMES, 4),
        4: (1, 16, 8 * _NUM_FRAMES, 8),
        7: (1, 8, 16 * _NUM_FRAMES, 16),
    }
    for idx, f, r in zip((1, 4, 7), feats, refs):
        assert f.shape == expected[idx], (idx, f.shape, expected[idx])
        assert f.dtype == jnp.float32
        assert bool(jnp.all(jnp.isfinite(f)))
        # Loose tolerance: bf16 MXU inputs (f32 accumulate + f32 SiLU) vs the
        # XLA default-precision f32 einsum reference.
        assert bool(jnp.allclose(f, r, atol=5e-2, rtol=5e-2)), idx
    print("KERNEL_OK")
</pallas_src>

<mosaic_0001>
module attributes {stable_mosaic.version = 11 : i64} {
  func.func @kernel(%arg0: i32, %arg1: memref<1x8x128xbf16, #tpu.memory_space<vmem>>, %arg2: memref<32x8xbf16, #tpu.memory_space<vmem>>, %arg3: memref<32x1xf32, #tpu.memory_space<vmem>>, %arg4: memref<1x8x128xbf16, #tpu.memory_space<vmem>>, %arg5: memref<16x8xbf16, #tpu.memory_space<vmem>>, %arg6: memref<16x1xf32, #tpu.memory_space<vmem>>, %arg7: memref<1x8x256xbf16, #tpu.memory_space<vmem>>, %arg8: memref<8x8xbf16, #tpu.memory_space<vmem>>, %arg9: memref<8x1xf32, #tpu.memory_space<vmem>>, %arg10: memref<1x32x128xf32, #tpu.memory_space<vmem>>, %arg11: memref<1x16x128xf32, #tpu.memory_space<vmem>>, %arg12: memref<1x8x256xf32, #tpu.memory_space<vmem>>) attributes {dimension_semantics = [#tpu.dimension_semantics<parallel>], iteration_bounds = array<i64: 4>, scalar_prefetch = 0 : i64, scratch_operands = 0 : i64, tpu.core_type = #tpu.core_type<tc>, window_params = [{transform_indices = @transform_0, window_bounds = array<i64: 1, 8, 128>}, {pipeline_mode = #tpu.pipeline_mode<synchronous>, transform_indices = @transform_1, window_bounds = array<i64: 32, 8>}, {pipeline_mode = #tpu.pipeline_mode<synchronous>, transform_indices = @transform_2, window_bounds = array<i64: 32, 1>}, {transform_indices = @transform_3, window_bounds = array<i64: 1, 8, 128>}, {pipeline_mode = #tpu.pipeline_mode<synchronous>, transform_indices = @transform_4, window_bounds = array<i64: 16, 8>}, {pipeline_mode = #tpu.pipeline_mode<synchronous>, transform_indices = @transform_5, window_bounds = array<i64: 16, 1>}, {transform_indices = @transform_6, window_bounds = array<i64: 1, 8, 256>}, {pipeline_mode = #tpu.pipeline_mode<synchronous>, transform_indices = @transform_7, window_bounds = array<i64: 8, 8>}, {pipeline_mode = #tpu.pipeline_mode<synchronous>, transform_indices = @transform_8, window_bounds = array<i64: 8, 1>}, {transform_indices = @transform_9, window_bounds = array<i64: 1, 32, 128>}, {transform_indices = @transform_10, window_bounds = array<i64: 1, 16, 128>}, {transform_indices = @transform_11, window_bounds = array<i64: 1, 8, 256>}]} {
    %c0 = arith.constant 0 : index
    %c0_0 = arith.constant 0 : index
    %0 = vector.load %arg2[%c0, %c0_0] : memref<32x8xbf16, #tpu.memory_space<vmem>>, vector<32x8xbf16>
    %c0_1 = arith.constant 0 : index
    %c0_2 = arith.constant 0 : index
    %c0_3 = arith.constant 0 : index
    %1 = vector.load %arg1[%c0_1, %c0_2, %c0_3] : memref<1x8x128xbf16, #tpu.memory_space<vmem>>, vector<1x8x128xbf16>
    %2 = vector.shape_cast %1 : vector<1x8x128xbf16> to vector<8x128xbf16>
    %cst = arith.constant dense<0.000000e+00> : vector<32x128xf32>
    %3 = tpu.matmul %0, %2, %cst {dimension_numbers = #tpu.dot_dimension_numbers<[1], [0], [0], [1], [0, 0, 1, 1], [], []>} : vector<32x8xbf16>, vector<8x128xbf16>, vector<32x128xf32> -> vector<32x128xf32>
    %c0_4 = arith.constant 0 : index
    %c0_5 = arith.constant 0 : index
    %4 = vector.load %arg3[%c0_4, %c0_5] : memref<32x1xf32, #tpu.memory_space<vmem>>, vector<32x1xf32>
    %5 = vector.broadcast %4 : vector<32x1xf32> to vector<32x128xf32>
    %6 = arith.addf %3, %5 : vector<32x128xf32>
    %7 = arith.negf %6 : vector<32x128xf32>
    %8 = math.exp %7 : vector<32x128xf32>
    %cst_6 = arith.constant 1.000000e+00 : f32
    %9 = vector.broadcast %cst_6 : f32 to vector<32x128xf32>
    %10 = arith.addf %9, %8 : vector<32x128xf32>
    %11 = arith.divf %9, %10 : vector<32x128xf32>
    %12 = arith.mulf %6, %11 : vector<32x128xf32>
    %c0_7 = arith.constant 0 : index
    %c0_8 = arith.constant 0 : index
    %c0_9 = arith.constant 0 : index
    %13 = vector.load %arg10[%c0_7, %c0_8, %c0_9] : memref<1x32x128xf32, #tpu.memory_space<vmem>>, vector<1x32x128xf32>
    %14 = vector.shape_cast %13 : vector<1x32x128xf32> to vector<32x128xf32>
    %15 = vector.shape_cast %12 : vector<32x128xf32> to vector<1x32x128xf32>
    tpu.vector_store %arg10[%c0_7, %c0_8, %c0_9], %15 {strides = array<i32>} : memref<1x32x128xf32, #tpu.memory_space<vmem>>, vector<1x32x128xf32>,
    %c0_10 = arith.constant 0 : index
    %c0_11 = arith.constant 0 : index
    %16 = vector.load %arg5[%c0_10, %c0_11] : memref<16x8xbf16, #tpu.memory_space<vmem>>, vector<16x8xbf16>
    %c0_12 = arith.constant 0 : index
    %c0_13 = arith.constant 0 : index
    %c0_14 = arith.constant 0 : index
    %17 = vector.load %arg4[%c0_12, %c0_13, %c0_14] : memref<1x8x128xbf16, #tpu.memory_space<vmem>>, vector<1x8x128xbf16>
    %18 = vector.shape_cast %17 : vector<1x8x128xbf16> to vector<8x128xbf16>
    %cst_15 = arith.constant dense<0.000000e+00> : vector<16x128xf32>
    %19 = tpu.matmul %16, %18, %cst_15 {dimension_numbers = #tpu.dot_dimension_numbers<[1], [0], [0], [1], [0, 0, 1, 1], [], []>} : vector<16x8xbf16>, vector<8x128xbf16>, vector<16x128xf32> -> vector<16x128xf32>
    %c0_16 = arith.constant 0 : index
    %c0_17 = arith.constant 0 : index
    %20 = vector.load %arg6[%c0_16, %c0_17] : memref<16x1xf32, #tpu.memory_space<vmem>>, vector<16x1xf32>
    %21 = vector.broadcast %20 : vector<16x1xf32> to vector<16x128xf32>
    %22 = arith.addf %19, %21 : vector<16x128xf32>
    %23 = arith.negf %22 : vector<16x128xf32>
    %24 = math.exp %23 : vector<16x128xf32>
    %cst_18 = arith.constant 1.000000e+00 : f32
    %25 = vector.broadcast %cst_18 : f32 to vector<16x128xf32>
    %26 = arith.addf %25, %24 : vector<16x128xf32>
    %27 = arith.divf %25, %26 : vector<16x128xf32>
    %28 = arith.mulf %22, %27 : vector<16x128xf32>
    %c0_19 = arith.constant 0 : index
    %c0_20 = arith.constant 0 : index
    %c0_21 = arith.constant 0 : index
    %29 = vector.load %arg11[%c0_19, %c0_20, %c0_21] : memref<1x16x128xf32, #tpu.memory_space<vmem>>, vector<1x16x128xf32>
    %30 = vector.shape_cast %29 : vector<1x16x128xf32> to vector<16x128xf32>
    %31 = vector.shape_cast %28 : vector<16x128xf32> to vector<1x16x128xf32>
    tpu.vector_store %arg11[%c0_19, %c0_20, %c0_21], %31 {strides = array<i32>} : memref<1x16x128xf32, #tpu.memory_space<vmem>>, vector<1x16x128xf32>,
    %c0_22 = arith.constant 0 : index
    %c0_23 = arith.constant 0 : index
    %32 = vector.load %arg8[%c0_22, %c0_23] : memref<8x8xbf16, #tpu.memory_space<vmem>>, vector<8x8xbf16>
    %c0_24 = arith.constant 0 : index
    %c0_25 = arith.constant 0 : index
    %c0_26 = arith.constant 0 : index
    %33 = vector.load %arg7[%c0_24, %c0_25, %c0_26] : memref<1x8x256xbf16, #tpu.memory_space<vmem>>, vector<1x8x256xbf16>
    %34 = vector.shape_cast %33 : vector<1x8x256xbf16> to vector<8x256xbf16>
    %cst_27 = arith.constant dense<0.000000e+00> : vector<8x256xf32>
    %35 = tpu.matmul %32, %34, %cst_27 {dimension_numbers = #tpu.dot_dimension_numbers<[1], [0], [0], [1], [0, 0, 1, 1], [], []>} : vector<8x8xbf16>, vector<8x256xbf16>, vector<8x256xf32> -> vector<8x256xf32>
    %c0_28 = arith.constant 0 : index
    %c0_29 = arith.constant 0 : index
    %36 = vector.load %arg9[%c0_28, %c0_29] : memref<8x1xf32, #tpu.memory_space<vmem>>, vector<8x1xf32>
    %37 = vector.broadcast %36 : vector<8x1xf32> to vector<8x256xf32>
    %38 = arith.addf %35, %37 : vector<8x256xf32>
    %39 = arith.negf %38 : vector<8x256xf32>
    %40 = math.exp %39 : vector<8x256xf32>
    %cst_30 = arith.constant 1.000000e+00 : f32
    %41 = vector.broadcast %cst_30 : f32 to vector<8x256xf32>
    %42 = arith.addf %41, %40 : vector<8x256xf32>
    %43 = arith.divf %41, %42 : vector<8x256xf32>
    %44 = arith.mulf %38, %43 : vector<8x256xf32>
    %c0_31 = arith.constant 0 : index
    %c0_32 = arith.constant 0 : index
    %c0_33 = arith.constant 0 : index
    %45 = vector.load %arg12[%c0_31, %c0_32, %c0_33] : memref<1x8x256xf32, #tpu.memory_space<vmem>>, vector<1x8x256xf32>
    %46 = vector.shape_cast %45 : vector<1x8x256xf32> to vector<8x256xf32>
    %47 = vector.shape_cast %44 : vector<8x256xf32> to vector<1x8x256xf32>
    tpu.vector_store %arg12[%c0_31, %c0_32, %c0_33], %47 {strides = array<i32>} : memref<1x8x256xf32, #tpu.memory_space<vmem>>, vector<1x8x256xf32>,
    return
  }
  func.func @transform_0(%arg0: i32) -> (i32, i32, i32) {
    %c0_i32 = arith.constant 0 : i32
    %c0_i32_0 = arith.constant 0 : i32
    %c0_i32_1 = arith.constant 0 : i32
    return %arg0, %c0_i32, %c0_i32_0 : i32, i32, i32
  }
  func.func @transform_1(%arg0: i32) -> (i32, i32) {
    %c0_i32 = arith.constant 0 : i32
    %c0_i32_0 = arith.constant 0 : i32
    %c0_i32_1 = arith.constant 0 : i32
    return %c0_i32, %c0_i32_0 : i32, i32
  }
  func.func @transform_2(%arg0: i32) -> (i32, i32) {
    %c0_i32 = arith.constant 0 : i32
    %c0_i32_0 = arith.constant 0 : i32
    %c0_i32_1 = arith.constant 0 : i32
    return %c0_i32, %c0_i32_0 : i32, i32
  }
  func.func @transform_3(%arg0: i32) -> (i32, i32, i32) {
    %c0_i32 = arith.constant 0 : i32
    %c0_i32_0 = arith.constant 0 : i32
    %c0_i32_1 = arith.constant 0 : i32
    return %arg0, %c0_i32, %c0_i32_0 : i32, i32, i32
  }
  func.func @transform_4(%arg0: i32) -> (i32, i32) {
    %c0_i32 = arith.constant 0 : i32
    %c0_i32_0 = arith.constant 0 : i32
    %c0_i32_1 = arith.constant 0 : i32
    return %c0_i32, %c0_i32_0 : i32, i32
  }
  func.func @transform_5(%arg0: i32) -> (i32, i32) {
    %c0_i32 = arith.constant 0 : i32
    %c0_i32_0 = arith.constant 0 : i32
    %c0_i32_1 = arith.constant 0 : i32
    return %c0_i32, %c0_i32_0 : i32, i32
  }
  func.func @transform_6(%arg0: i32) -> (i32, i32, i32) {
    %c0_i32 = arith.constant 0 : i32
    %c0_i32_0 = arith.constant 0 : i32
    %c0_i32_1 = arith.constant 0 : i32
    return %arg0, %c0_i32, %c0_i32_0 : i32, i32, i32
  }
  func.func @transform_7(%arg0: i32) -> (i32, i32) {
    %c0_i32 = arith.constant 0 : i32
    %c0_i32_0 = arith.constant 0 : i32
    %c0_i32_1 = arith.constant 0 : i32
    return %c0_i32, %c0_i32_0 : i32, i32
  }
  func.func @transform_8(%arg0: i32) -> (i32, i32) {
    %c0_i32 = arith.constant 0 : i32
    %c0_i32_0 = arith.constant 0 : i32
    %c0_i32_1 = arith.constant 0 : i32
    return %c0_i32, %c0_i32_0 : i32, i32
  }
  func.func @transform_9(%arg0: i32) -> (i32, i32, i32) {
    %c0_i32 = arith.constant 0 : i32
    %c0_i32_0 = arith.constant 0 : i32
    %c0_i32_1 = arith.constant 0 : i32
    return %arg0, %c0_i32, %c0_i32_0 : i32, i32, i32
  }
  func.func @transform_10(%arg0: i32) -> (i32, i32, i32) {
    %c0_i32 = arith.constant 0 : i32
    %c0_i32_0 = arith.constant 0 : i32
    %c0_i32_1 = arith.constant 0 : i32
    return %arg0, %c0_i32, %c0_i32_0 : i32, i32, i32
  }
  func.func @transform_11(%arg0: i32) -> (i32, i32, i32) {
    %c0_i32 = arith.constant 0 : i32
    %c0_i32_0 = arith.constant 0 : i32
    %c0_i32_1 = arith.constant 0 : i32
    return %arg0, %c0_i32, %c0_i32_0 : i32, i32, i32
  }
}

</mosaic_0001>

<llo_original>
// kernel: tpu_custom_call.1
$region0: #{tpu_custom_call.1}
  #allocation0 [shape = 'u32[]', space=smem, size = 0x4, offset = 0x4, fixed_abs, tag = 'smem constant byte address 0x4 - core index']
  #allocation1 [shape = 'u32[72,128]{1,0:T(1,128)}', space=vmem, size = 0x9000, scoped, tag = 'internal scratch']
  %s0 = inlined_call_operand.vmem [shape: bf16[4,8,128], index: 0, kind: input, shape index: {}]
  %s1 = inlined_call_operand.vmem [shape: bf16[32,8], index: 1, kind: input, shape index: {}]
  %s2 = inlined_call_operand.vmem [shape: f32[32,1], index: 2, kind: input, shape index: {}]
  %s3 = inlined_call_operand.vmem [shape: bf16[4,8,128], index: 3, kind: input, shape index: {}]
  %s4 = inlined_call_operand.vmem [shape: bf16[16,8], index: 4, kind: input, shape index: {}]
  %s5 = inlined_call_operand.vmem [shape: f32[16,1], index: 5, kind: input, shape index: {}]
  %s6 = inlined_call_operand.vmem [shape: bf16[4,8,256], index: 6, kind: input, shape index: {}]
  %s7 = inlined_call_operand.vmem [shape: bf16[8,8], index: 7, kind: input, shape index: {}]
  %s8 = inlined_call_operand.vmem [shape: f32[8,1], index: 8, kind: input, shape index: {}]
  %s9 = inlined_call_operand.hbm [shape: f32[4,32,128], index: 9, kind: output, shape index: {0}]
  %s10 = inlined_call_operand.hbm [shape: f32[4,16,128], index: 10, kind: output, shape index: {1}]
  %s11 = inlined_call_operand.hbm [shape: f32[4,8,256], index: 11, kind: output, shape index: {2}]
  %12 = xla_tuple %s9, %s10, %s11
  %s13 = sld [smem:[#allocation0]]
  $region85: #{tpu_custom_call.1} parent=0
    _
  %s15 = ssub.s32 1, %s13
  %s16 = scalar_select 0, %s15, %s13
  $region1: #{tpu_custom_call.1} parent=0
    #allocation2 [shape = 'u8[32768]{0}', space=vmem, size = 0x8000, scoped, tag = 'output window, operand 0']
    #allocation3 [shape = 's32[2]{0}', space=sflag, size = 0x8, scoped, tag = 'scoped memory for tpu_custom_call.1']
    #allocation4 [shape = 'u8[16384]{0}', space=vmem, size = 0x4000, scoped, tag = 'output window, operand 1']
    #allocation5 [shape = 's32[2]{0}', space=sflag, size = 0x8, scoped, tag = 'scoped memory for tpu_custom_call.1']
    #allocation6 [shape = 'u8[16384]{0}', space=vmem, size = 0x4000, scoped, tag = 'output window, operand 2']
    %17 = vsyncpa [#allocation3], 0
    %s18 = scalar_lea.sflag [#allocation3], 1
    %19 = vsyncpa %s18, 0
    %20 = vsyncpa [#allocation5], 0
    %s21 = scalar_lea.sflag [#allocation5], 1
    %22 = vsyncpa %s21, 0
    loop: start=0, step=1, limit=6
    $region2: #{tpu_custom_call.1} parent=1 // loop_pre_header
      _
    $region3: #{tpu_custom_call.1} parent=1 // loop_header
      %s24 = sphi 0, %s28
      %p25 = scmp.ge.s32.totalorder %s24, 6
      %s34 = sphi 0, %s36
      %s37 = sphi 0, %s34
      %s38 = sphi 0, %s37
      %s54 = sphi 0, %s38
      %s58 = sphi 0, %s58
      %s60 = sphi 0, %s58
      %s61 = sphi 0, %s60
      %s75 = sphi 0, %s61
      %s79 = sphi 0, %s79
      %s81 = sphi 0, %s79
      %s82 = sphi 0, %s81
      %s96 = sphi 0, %s82
      %s102 = sphi 0, %s104
      %s105 = sphi 0, %s102
      %s106 = sphi 0, %s105
      %s122 = sphi 0, %s106
      %s126 = sphi 0, %s126
      %s128 = sphi 0, %s126
      %s129 = sphi 0, %s128
      %s143 = sphi 0, %s129
      %s147 = sphi 0, %s147
      %s149 = sphi 0, %s147
      %s150 = sphi 0, %s149
      %s164 = sphi 0, %s150
      %s170 = sphi 0, %s172
      %s173 = sphi 0, %s170
      %s174 = sphi 0, %s173
      %s190 = sphi 0, %s174
      %s194 = sphi 0, %s194
      %s196 = sphi 0, %s194
      %s197 = sphi 0, %s196
      %s211 = sphi 0, %s197
      %s215 = sphi 0, %s215
      %s217 = sphi 0, %s215
      %s218 = sphi 0, %s217
      %s232 = sphi 0, %s218
      %s238 = sphi 0, %s240
      %s241 = sphi 0, %s238
      %s242 = sphi 0, %s241
      %s258 = sphi 0, %s242
      %s264 = sphi 0, %s266
      %s267 = sphi 0, %s264
      %s268 = sphi 0, %s267
      %s284 = sphi 0, %s268
      %s290 = sphi 0, %s292
      %s293 = sphi 0, %s290
      %s294 = sphi 0, %s293
      %s310 = sphi 0, %s294
    $region4: #{tpu_custom_call.1} parent=1 // loop_header_branch
      %27 = sbr.rel (%p25) target = $region8
    $region5: #{tpu_custom_call.1} parent=1 // loop_body
      %s29 = ssub.s32 %s24, 1
      %s30 = ssub.s32 %s24, 2
      %s31 = sadd.s32 %s24, 1
      %s32 = ssub.s32 %s24, %s31
      %p33 = scmp.eq.s32.totalorder %s32, 0
      %s35 = sadd.s32 %s34, 1
      %s36 = scalar_select %p33, %s34, %s35
      %p39 = pneg %p33
      %p40 = scmp.eq.s32.totalorder %s24, 3
      %p41 = por %p39, %p40
      %p42 = scmp.ne.s32.totalorder %s34, %s37
      %p43 = scmp.eq.s32.totalorder %s24, 0
      %p44 = por %p42, %p43
      %p45 = scmp.ne.s32.totalorder %s34, %s37
      %p46 = scmp.eq.s32.totalorder %s29, 3
      %p47 = por %p45, %p46
      %p48 = scmp.ne.s32.totalorder %s37, %s38
      %p49 = scmp.eq.s32.totalorder %s29, 0
      %p50 = por %p48, %p49
      %p51 = scmp.ne.s32.totalorder %s37, %s38
      %p52 = scmp.eq.s32.totalorder %s30, 3
      %p53 = por %p51, %p52
      %p55 = scmp.ne.s32.totalorder %s38, %s54
      %p56 = scmp.eq.s32.totalorder %s30, 0
      %p57 = por %p55, %p56
      %s59 = sadd.s32 %s58, 1
      %p62 = scmp.eq.s32.totalorder %s24, 3
      %p63 = scmp.ne.s32.totalorder %s58, %s60
      %p64 = scmp.eq.s32.totalorder %s24, 0
      %p65 = por %p63, %p64
      %p66 = scmp.ne.s32.totalorder %s58, %s60
      %p67 = scmp.eq.s32.totalorder %s29, 3
      %p68 = por %p66, %p67
      %p69 = scmp.ne.s32.totalorder %s60, %s61
      %p70 = scmp.eq.s32.totalorder %s29, 0
      %p71 = por %p69, %p70
      %p72 = scmp.ne.s32.totalorder %s60, %s61
      %p73 = scmp.eq.s32.totalorder %s30, 3
      %p74 = por %p72, %p73
      %p76 = scmp.ne.s32.totalorder %s61, %s75
      %p77 = scmp.eq.s32.totalorder %s30, 0
      %p78 = por %p76, %p77
      %s80 = sadd.s32 %s79, 1
      %p83 = scmp.eq.s32.totalorder %s24, 3
      %p84 = scmp.ne.s32.totalorder %s79, %s81
      %p85 = scmp.eq.s32.totalorder %s24, 0
      %p86 = por %p84, %p85
      %p87 = scmp.ne.s32.totalorder %s79, %s81
      %p88 = scmp.eq.s32.totalorder %s29, 3
      %p89 = por %p87, %p88
      %p90 = scmp.ne.s32.totalorder %s81, %s82
      %p91 = scmp.eq.s32.totalorder %s29, 0
      %p92 = por %p90, %p91
      %p93 = scmp.ne.s32.totalorder %s81, %s82
      %p94 = scmp.eq.s32.totalorder %s30, 3
      %p95 = por %p93, %p94
      %p97 = scmp.ne.s32.totalorder %s82, %s96
      %p98 = scmp.eq.s32.totalorder %s30, 0
      %p99 = por %p97, %p98
      %s100 = ssub.s32 %s24, %s31
      %p101 = scmp.eq.s32.totalorder %s100, 0
      %s103 = sadd.s32 %s102, 1
      %s104 = scalar_select %p101, %s102, %s103
      %p107 = pneg %p101
      %p108 = scmp.eq.s32.totalorder %s24, 3
      %p109 = por %p107, %p108
      %p110 = scmp.ne.s32.totalorder %s102, %s105
      %p111 = scmp.eq.s32.totalorder %s24, 0
      %p112 = por %p110, %p111
      %p113 = scmp.ne.s32.totalorder %s102, %s105
      %p114 = scmp.eq.s32.totalorder %s29, 3
      %p115 = por %p113, %p114
      %p116 = scmp.ne.s32.totalorder %s105, %s106
      %p117 = scmp.eq.s32.totalorder %s29, 0
      %p118 = por %p116, %p117
      %p119 = scmp.ne.s32.totalorder %s105, %s106
      %p120 = scmp.eq.s32.totalorder %s30, 3
      %p121 = por %p119, %p120
      %p123 = scmp.ne.s32.totalorder %s106, %s122
      %p124 = scmp.eq.s32.totalorder %s30, 0
      %p125 = por %p123, %p124
      %s127 = sadd.s32 %s126, 1
      %p130 = scmp.eq.s32.totalorder %s24, 3
      %p131 = scmp.ne.s32.totalorder %s126, %s128
      %p132 = scmp.eq.s32.totalorder %s24, 0
      %p133 = por %p131, %p132
      %p134 = scmp.ne.s32.totalorder %s126, %s128
      %p135 = scmp.eq.s32.totalorder %s29, 3
      %p136 = por %p134, %p135
      %p137 = scmp.ne.s32.totalorder %s128, %s129
      %p138 = scmp.eq.s32.totalorder %s29, 0
      %p139 = por %p137, %p138
      %p140 = scmp.ne.s32.totalorder %s128, %s129
      %p141 = scmp.eq.s32.totalorder %s30, 3
      %p142 = por %p140, %p141
      %p144 = scmp.ne.s32.totalorder %s129, %s143
      %p145 = scmp.eq.s32.totalorder %s30, 0
      %p146 = por %p144, %p145
      %s148 = sadd.s32 %s147, 1
      %p151 = scmp.eq.s32.totalorder %s24, 3
      %p152 = scmp.ne.s32.totalorder %s147, %s149
      %p153 = scmp.eq.s32.totalorder %s24, 0
      %p154 = por %p152, %p153
      %p155 = scmp.ne.s32.totalorder %s147, %s149
      %p156 = scmp.eq.s32.totalorder %s29, 3
      %p157 = por %p155, %p156
      %p158 = scmp.ne.s32.totalorder %s149, %s150
      %p159 = scmp.eq.s32.totalorder %s29, 0
      %p160 = por %p158, %p159
      %p161 = scmp.ne.s32.totalorder %s149, %s150
      %p162 = scmp.eq.s32.totalorder %s30, 3
      %p163 = por %p161, %p162
      %p165 = scmp.ne.s32.totalorder %s150, %s164
      %p166 = scmp.eq.s32.totalorder %s30, 0
      %p167 = por %p165, %p166
      %s168 = ssub.s32 %s24, %s31
      %p169 = scmp.eq.s32.totalorder %s168, 0
      %s171 = sadd.s32 %s170, 1
      %s172 = scalar_select %p169, %s170, %s171
      %p175 = pneg %p169
      %p176 = scmp.eq.s32.totalorder %s24, 3
      %p177 = por %p175, %p176
      %p178 = scmp.ne.s32.totalorder %s170, %s173
      %p179 = scmp.eq.s32.totalorder %s24, 0
      %p180 = por %p178, %p179
      %p181 = scmp.ne.s32.totalorder %s170, %s173
      %p182 = scmp.eq.s32.totalorder %s29, 3
      %p183 = por %p181, %p182
      %p184 = scmp.ne.s32.totalorder %s173, %s174
      %p185 = scmp.eq.s32.totalorder %s29, 0
      %p186 = por %p184, %p185
      %p187 = scmp.ne.s32.totalorder %s173, %s174
      %p188 = scmp.eq.s32.totalorder %s30, 3
      %p189 = por %p187, %p188
      %p191 = scmp.ne.s32.totalorder %s174, %s190
      %p192 = scmp.eq.s32.totalorder %s30, 0
      %p193 = por %p191, %p192
      %s195 = sadd.s32 %s194, 1
      %p198 = scmp.eq.s32.totalorder %s24, 3
      %p199 = scmp.ne.s32.totalorder %s194, %s196
      %p200 = scmp.eq.s32.totalorder %s24, 0
      %p201 = por %p199, %p200
      %p202 = scmp.ne.s32.totalorder %s194, %s196
      %p203 = scmp.eq.s32.totalorder %s29, 3
      %p204 = por %p202, %p203
      %p205 = scmp.ne.s32.totalorder %s196, %s197
      %p206 = scmp.eq.s32.totalorder %s29, 0
      %p207 = por %p205, %p206
      %p208 = scmp.ne.s32.totalorder %s196, %s197
      %p209 = scmp.eq.s32.totalorder %s30, 3
      %p210 = por %p208, %p209
      %p212 = scmp.ne.s32.totalorder %s197, %s211
      %p213 = scmp.eq.s32.totalorder %s30, 0
      %p214 = por %p212, %p213
      %s216 = sadd.s32 %s215, 1
      %p219 = scmp.eq.s32.totalorder %s24, 3
      %p220 = scmp.ne.s32.totalorder %s215, %s217
      %p221 = scmp.eq.s32.totalorder %s24, 0
      %p222 = por %p220, %p221
      %p223 = scmp.ne.s32.totalorder %s215, %s217
      %p224 = scmp.eq.s32.totalorder %s29, 3
      %p225 = por %p223, %p224
      %p226 = scmp.ne.s32.totalorder %s217, %s218
      %p227 = scmp.eq.s32.totalorder %s29, 0
      %p228 = por %p226, %p227
      %p229 = scmp.ne.s32.totalorder %s217, %s218
      %p230 = scmp.eq.s32.totalorder %s30, 3
      %p231 = por %p229, %p230
      %p233 = scmp.ne.s32.totalorder %s218, %s232
      %p234 = scmp.eq.s32.totalorder %s30, 0
      %p235 = por %p233, %p234
      %s236 = ssub.s32 %s24, %s31
      %p237 = scmp.eq.s32.totalorder %s236, 0
      %s239 = sadd.s32 %s238, 1
      %s240 = scalar_select %p237, %s238, %s239
      %p243 = pneg %p237
      %p244 = scmp.eq.s32.totalorder %s24, 3
      %p245 = por %p243, %p244
      %p246 = scmp.ne.s32.totalorder %s238, %s241
      %p247 = scmp.eq.s32.totalorder %s24, 0
      %p248 = por %p246, %p247
      %p249 = scmp.ne.s32.totalorder %s238, %s241
      %p250 = scmp.eq.s32.totalorder %s29, 3
      %p251 = por %p249, %p250
      %p252 = scmp.ne.s32.totalorder %s241, %s242
      %p253 = scmp.eq.s32.totalorder %s29, 0
      %p254 = por %p252, %p253
      %p255 = scmp.ne.s32.totalorder %s241, %s242
      %p256 = scmp.eq.s32.totalorder %s30, 3
      %p257 = por %p255, %p256
      %p259 = scmp.ne.s32.totalorder %s242, %s258
      %p260 = scmp.eq.s32.totalorder %s30, 0
      %p261 = por %p259, %p260
      %s262 = ssub.s32 %s24, %s31
      %p263 = scmp.eq.s32.totalorder %s262, 0
      %s265 = sadd.s32 %s264, 1
      %s266 = scalar_select %p263, %s264, %s265
      %p269 = pneg %p263
      %p270 = scmp.eq.s32.totalorder %s24, 3
      %p271 = por %p269, %p270
      %p272 = scmp.ne.s32.totalorder %s264, %s267
      %p273 = scmp.eq.s32.totalorder %s24, 0
      %p274 = por %p272, %p273
      %p275 = scmp.ne.s32.totalorder %s264, %s267
      %p276 = scmp.eq.s32.totalorder %s29, 3
      %p277 = por %p275, %p276
      %p278 = scmp.ne.s32.totalorder %s267, %s268
      %p279 = scmp.eq.s32.totalorder %s29, 0
      %p280 = por %p278, %p279
      %p281 = scmp.ne.s32.totalorder %s267, %s268
      %p282 = scmp.eq.s32.totalorder %s30, 3
      %p283 = por %p281, %p282
      %p285 = scmp.ne.s32.totalorder %s268, %s284
      %p286 = scmp.eq.s32.totalorder %s30, 0
      %p287 = por %p285, %p286
      %s288 = ssub.s32 %s24, %s31
      %p289 = scmp.eq.s32.totalorder %s288, 0
      %s291 = sadd.s32 %s290, 1
      %s292 = scalar_select %p289, %s290, %s291
      %p295 = pneg %p289
      %p296 = scmp.eq.s32.totalorder %s24, 3
      %p297 = por %p295, %p296
      %p298 = scmp.ne.s32.totalorder %s290, %s293
      %p299 = scmp.eq.s32.totalorder %s24, 0
      %p300 = por %p298, %p299
      %p301 = scmp.ne.s32.totalorder %s290, %s293
      %p302 = scmp.eq.s32.totalorder %s29, 3
      %p303 = por %p301, %p302
      %p304 = scmp.ne.s32.totalorder %s293, %s294
      %p305 = scmp.eq.s32.totalorder %s29, 0
      %p306 = por %p304, %p305
      %p307 = scmp.ne.s32.totalorder %s293, %s294
      %p308 = scmp.eq.s32.totalorder %s30, 3
      %p309 = por %p307, %p308
      %p311 = scmp.ne.s32.totalorder %s294, %s310
      %p312 = scmp.eq.s32.totalorder %s30, 0
      %p313 = por %p311, %p312
      %p314 = scmp.le.s32.totalorder 1, %s24
      %p315 = scmp.lt.s32.totalorder %s24, 5
      %p316 = pnand %p314, %p315
      %p317 = pneg %p316
      // Predicated region
      $region9: #{tpu_custom_call.1} parent=5 // pred_check
        _
      $region10: #{tpu_custom_call.1} parent=5 // pred_check_branch
        %319 = sbr.rel (%p316) target = $region12
      $region11: #{tpu_custom_call.1} parent=5 // pred_region
        %s320 = ssub.s32 %s24, 1
        // Predicated region
        $region13: #{tpu_custom_call.1} parent=11 // pred_check
          %p321 = pneg %p71
        $region14: #{tpu_custom_call.1} parent=11 // pred_check_branch
          %323 = sbr.rel (%p321) target = $region16
        $region15: #{tpu_custom_call.1} parent=11 // pred_region
          _
        $region16: #{tpu_custom_call.1} parent=11 // pred_fallthru
          _
        // Predicated region
        $region17: #{tpu_custom_call.1} parent=11 // pred_check
          %p324 = pneg %p92
        $region18: #{tpu_custom_call.1} parent=11 // pred_check_branch
          %326 = sbr.rel (%p324) target = $region20
        $region19: #{tpu_custom_call.1} parent=11 // pred_region
          _
        $region20: #{tpu_custom_call.1} parent=11 // pred_fallthru
          _
        // Predicated region
        $region21: #{tpu_custom_call.1} parent=11 // pred_check
          %p327 = pneg %p139
        $region22: #{tpu_custom_call.1} parent=11 // pred_check_branch
          %329 = sbr.rel (%p327) target = $region24
        $region23: #{tpu_custom_call.1} parent=11 // pred_region
          _
        $region24: #{tpu_custom_call.1} parent=11 // pred_fallthru
          _
        // Predicated region
        $region25: #{tpu_custom_call.1} parent=11 // pred_check
          %p330 = pneg %p160
        $region26: #{tpu_custom_call.1} parent=11 // pred_check_branch
          %332 = sbr.rel (%p330) target = $region28
        $region27: #{tpu_custom_call.1} parent=11 // pred_region
          _
        $region28: #{tpu_custom_call.1} parent=11 // pred_fallthru
          _
        // Predicated region
        $region29: #{tpu_custom_call.1} parent=11 // pred_check
          %p333 = pneg %p207
        $region30: #{tpu_custom_call.1} parent=11 // pred_check_branch
          %335 = sbr.rel (%p333) target = $region32
        $region31: #{tpu_custom_call.1} parent=11 // pred_region
          _
        $region32: #{tpu_custom_call.1} parent=11 // pred_fallthru
          _
        // Predicated region
        $region33: #{tpu_custom_call.1} parent=11 // pred_check
          %p336 = pneg %p228
        $region34: #{tpu_custom_call.1} parent=11 // pred_check_branch
          %338 = sbr.rel (%p336) target = $region36
        $region35: #{tpu_custom_call.1} parent=11 // pred_region
          _
        $region36: #{tpu_custom_call.1} parent=11 // pred_fallthru
          _
      $region12: #{tpu_custom_call.1} parent=5 // pred_fallthru
        _
      %p339 = scmp.lt.s32.totalorder %s24, 4
      // Predicated region
      $region37: #{tpu_custom_call.1} parent=5 // pred_check
        %p340 = pneg %p339
      $region38: #{tpu_custom_call.1} parent=5 // pred_check_branch
        %342 = sbr.rel (%p340) target = $region40
      $region39: #{tpu_custom_call.1} parent=5 // pred_region
        // Predicated region
        $region41: #{tpu_custom_call.1} parent=39 // pred_check
          %p343 = pneg %p44
        $region42: #{tpu_custom_call.1} parent=39 // pred_check_branch
          %345 = sbr.rel (%p343) target = $region44
        $region43: #{tpu_custom_call.1} parent=39 // pred_region
          %p346 = scmp.lt.s32.totalorder %s24, 3
          %s347 = scalar_select %p346, %s24, 3
          %s348 = smul.addr %s347, 4
          %s349 = scalar_lea.vmem %s0, %s348
        $region44: #{tpu_custom_call.1} parent=39 // pred_fallthru
          _
        // Predicated region
        $region45: #{tpu_custom_call.1} parent=39 // pred_check
          %p350 = pneg %p112
        $region46: #{tpu_custom_call.1} parent=39 // pred_check_branch
          %352 = sbr.rel (%p350) target = $region48
        $region47: #{tpu_custom_call.1} parent=39 // pred_region
          %p353 = scmp.lt.s32.totalorder %s24, 3
          %s354 = scalar_select %p353, %s24, 3
          %s355 = smul.addr %s354, 4
          %s356 = scalar_lea.vmem %s3, %s355
        $region48: #{tpu_custom_call.1} parent=39 // pred_fallthru
          _
        // Predicated region
        $region49: #{tpu_custom_call.1} parent=39 // pred_check
          %p357 = pneg %p180
        $region50: #{tpu_custom_call.1} parent=39 // pred_check_branch
          %359 = sbr.rel (%p357) target = $region52
        $region51: #{tpu_custom_call.1} parent=39 // pred_region
          %p360 = scmp.lt.s32.totalorder %s24, 3
          %s361 = scalar_select %p360, %s24, 3
          %s362 = smul.addr %s361, 2
          %s363 = smul.addr %s362, 4
          %s364 = scalar_lea.vmem %s6, %s363
        $region52: #{tpu_custom_call.1} parent=39 // pred_fallthru
          _
      $region40: #{tpu_custom_call.1} parent=5 // pred_fallthru
        _
      %p365 = scmp.le.s32.totalorder 1, %s24
      %p366 = scmp.lt.s32.totalorder %s24, 5
      %p367 = pnand %p365, %p366
      %p368 = pneg %p367
      // Predicated region
      $region53: #{tpu_custom_call.1} parent=5 // pred_check
        _
      $region54: #{tpu_custom_call.1} parent=5 // pred_check_branch
        %370 = sbr.rel (%p367) target = $region56
      $region55: #{tpu_custom_call.1} parent=5 // pred_region
        %s371 = ssub.s32 %s24, 1
        %p372 = scmp.lt.s32.totalorder %s29, 3
        %s373 = scalar_select %p372, %s29, 3
        %s374 = smul.addr %s373, 4
        %s375 = scalar_lea.vmem %s0, %s374
        %p376 = pneg %p50
        %p377 = pneg %p47
        %p378 = pneg %p71
        %p379 = pneg %p68
        %p380 = pneg %p92
        %p381 = pneg %p89
        %p382 = scmp.lt.s32.totalorder %s29, 3
        %s383 = scalar_select %p382, %s29, 3
        %s384 = smul.addr %s383, 4
        %s385 = scalar_lea.vmem %s3, %s384
        %p386 = pneg %p118
        %p387 = pneg %p115
        %p388 = pneg %p139
        %p389 = pneg %p136
        %p390 = pneg %p160
        %p391 = pneg %p157
        %p392 = scmp.lt.s32.totalorder %s29, 3
        %s393 = scalar_select %p392, %s29, 3
        %s394 = smul.addr %s393, 2
        %s395 = smul.addr %s394, 4
        %s396 = scalar_lea.vmem %s6, %s395
        %p397 = pneg %p186
        %p398 = pneg %p183
        %p399 = pneg %p207
        %p400 = pneg %p204
        %p401 = pneg %p228
        %p402 = pneg %p225
        %p403 = pneg %p254
        %p404 = pneg %p251
        %s405 = sand.u32 %s241, 1
        %s406 = scalar_lea.sflag [#allocation3], %s405
        %s407 = sand.u32 %s241, 1
        %s408 = smul.addr %s407, 32
        %s409 = scalar_lea.vmem [#allocation2], %s408
        %p410 = pneg %p280
        %p411 = pneg %p277
        %s412 = sand.u32 %s29, 1
        %s413 = scalar_lea.sflag [#allocation5], %s412
        %s414 = sand.u32 %s267, 1
        %s415 = smul.addr %s414, 16
        %s416 = scalar_lea.vmem [#allocation4], %s415
        %p417 = pneg %p306
        %p418 = pneg %p303
        %s419 = sand.u32 %s29, 1
        %s420 = scalar_lea.sflag [#allocation5], %s419
        %s421 = sand.u32 %s293, 1
        %s422 = smul.addr %s421, 16
        %s423 = scalar_lea.vmem [#allocation6], %s422
        %p424 = scmp.lt.s32.totalorder %s29, 3
        %s425 = scalar_select %p424, %s29, 3
        %s426 = smul.addr %s425, 4
        %s427 = scalar_lea.vmem %s0, %s426
        %p428 = scmp.lt.s32.totalorder %s29, 3
        %s429 = scalar_select %p428, %s29, 3
        %s430 = smul.addr %s429, 4
        %s431 = scalar_lea.vmem %s3, %s430
        %p432 = scmp.lt.s32.totalorder %s29, 3
        %s433 = scalar_select %p432, %s29, 3
        %s434 = smul.addr %s433, 2
        %s435 = smul.addr %s434, 4
        %s436 = scalar_lea.vmem %s6, %s435
        %v438 = vld [vmem:[%s1] sm:$0xf]
        %v439 = vld [vmem:[%s1 + $0x4] sm:$0xf]
        %v440 = vld [vmem:[%s1 + $0x8] sm:$0xf]
        %v441 = vld [vmem:[%s1 + $0xc] sm:$0xf]
        %v442 = vld [vmem:[%s427] sm:$0xf]
        %v443 = vld [vmem:[%s2] sm:$0xff]
        %v444 = vld [vmem:[%s2 + $0x8] sm:$0xff]
        %v445 = vld [vmem:[%s2 + $0x10] sm:$0xff]
        %v446 = vld [vmem:[%s2 + $0x18] sm:$0xff]
        %448 = vset.pattern.permute.xlu0 0
        %449 = vperm.xlu0 %448, %v443
        %v450 = vpop.permute.xlu0 %449
        %453 = vset.pattern.permute.xlu0 0
        %454 = vperm.xlu0 %453, %v444
        %v455 = vpop.permute.xlu0 %454
        %458 = vset.pattern.permute.xlu0 0
        %459 = vperm.xlu0 %458, %v445
        %v460 = vpop.permute.xlu0 %459
        %463 = vset.pattern.permute.xlu0 0
        %464 = vperm.xlu0 %463, %v446
        %v465 = vpop.permute.xlu0 %464
        %v471 = vunpack.c.l.b16 %v438
        %v472 = vunpack.c.l.b16 %v439
        %v473 = vunpack.c.l.b16 %v440
        %v474 = vunpack.c.l.b16 %v441
        %v475 = vpack.c.b16 %v472, %v471
        %v476 = vpack.c.b16 %v474, %v473
        %vm477 = vcmask 64512
        %v479 = vsel %vm477, %v475, 0
        %v482 = vsel %vm477, %v476, 0
        %vm484 = vcmask 1043456
        %v486 = vsel %vm484, %v442, 0
        %488 = vmatpush.bf16.msra.mxu0 0
        %489 = vmatpush.bf16.msra.mxu0 0
        %490 = vmatpush.bf16.msra.mxu0 0
        %491 = vmatpush.bf16.msra.mxu0 0
        %492 = vmatpush.bf16.msra.mxu0 0
        %493 = vmatpush.bf16.msra.mxu0 0
        %494 = vmatpush.bf16.msra.mxu0 0
        %495 = vmatpush.bf16.msra.mxu0 %v486
        %496 = vmatmul.bf16.gmra.mxu0 %v479
        %v497 = vpop.f32.mrf.mxu0
        %v498 = vadd.f32 %v450, %v497
        %v499 = vpop.f32.mrf.mxu0
        %v500 = vadd.f32 %v455, %v499
        %501 = vmatmul.bf16.gmra.mxu0 %v482
        %v502 = vpop.f32.mrf.mxu0
        %v503 = vadd.f32 %v460, %v502
        %v504 = vpop.f32.mrf.mxu0
        %v505 = vadd.f32 %v465, %v504
        %506 = vdwg.mxu0
        %v507 = vxor.u32 %v498, 2147483648
        %v508 = vxor.u32 %v500, 2147483648
        %v509 = vxor.u32 %v503, 2147483648
        %v510 = vxor.u32 %v505, 2147483648
        %v511 = vmul.f32 %v507, 1.442695
        %v512 = vpow.pop %v511
        %v513 = vmul.f32 %v508, 1.442695
        %v514 = vpow.pop %v513
        %v515 = vmul.f32 %v509, 1.442695
        %v516 = vpow.pop %v515
        %v517 = vmul.f32 %v510, 1.442695
        %v518 = vpow.pop %v517
        %v519 = vadd.f32 %v512, 1.0
        %v520 = vadd.f32 %v514, 1.0
        %v521 = vadd.f32 %v516, 1.0
        %v522 = vadd.f32 %v518, 1.0
        %v523 = vrcp.pop %v519
        %v524 = vmul.f32 %v519, %v523
        %v525 = vsub.f32 1.0, %v524
        %v526 = vmul.f32 %v523, %v525
        %v527 = vadd.f32 %v523, %v526
        %vm528 = vweird.f32 %v519
        %vm529 = vweird.f32 %v523
        %vm530 = vmor %vm528, %vm529
        %v531 = vsel %vm530, %v523, %v527
        %v532 = vand.u32 2147483647, %v519
        %vm533 = vcmp.eq.f32.partialorder %v532, 8.507059e+37
        %v534 = vand.u32 %v519, 2147483648
        %v535 = vor.u32 1.1754944e-38, %v534
        %v536 = vsel %vm533, %v535, %v531
        %v537 = vmul.f32 1.0, %v536
        %v538 = vrcp.pop %v520
        %v539 = vmul.f32 %v520, %v538
        %v540 = vsub.f32 1.0, %v539
        %v541 = vmul.f32 %v538, %v540
        %v542 = vadd.f32 %v538, %v541
        %vm543 = vweird.f32 %v520
        %vm544 = vweird.f32 %v538
        %vm545 = vmor %vm543, %vm544
        %v546 = vsel %vm545, %v538, %v542
        %v547 = vand.u32 2147483647, %v520
        %vm548 = vcmp.eq.f32.partialorder %v547, 8.507059e+37
        %v549 = vand.u32 %v520, 2147483648
        %v550 = vor.u32 1.1754944e-38, %v549
        %v551 = vsel %vm548, %v550, %v546
        %v552 = vmul.f32 1.0, %v551
        %v553 = vrcp.pop %v521
        %v554 = vmul.f32 %v521, %v553
        %v555 = vsub.f32 1.0, %v554
        %v556 = vmul.f32 %v553, %v555
        %v557 = vadd.f32 %v553, %v556
        %vm558 = vweird.f32 %v521
        %vm559 = vweird.f32 %v553
        %vm560 = vmor %vm558, %vm559
        %v561 = vsel %vm560, %v553, %v557
        %v562 = vand.u32 2147483647, %v521
        %vm563 = vcmp.eq.f32.partialorder %v562, 8.507059e+37
        %v564 = vand.u32 %v521, 2147483648
        %v565 = vor.u32 1.1754944e-38, %v564
        %v566 = vsel %vm563, %v565, %v561
        %v567 = vmul.f32 1.0, %v566
        %v568 = vrcp.pop %v522
        %v569 = vmul.f32 %v522, %v568
        %v570 = vsub.f32 1.0, %v569
        %v571 = vmul.f32 %v568, %v570
        %v572 = vadd.f32 %v568, %v571
        %vm573 = vweird.f32 %v522
        %vm574 = vweird.f32 %v568
        %vm575 = vmor %vm573, %vm574
        %v576 = vsel %vm575, %v568, %v572
        %v577 = vand.u32 2147483647, %v522
        %vm578 = vcmp.eq.f32.partialorder %v577, 8.507059e+37
        %v579 = vand.u32 %v522, 2147483648
        %v580 = vor.u32 1.1754944e-38, %v579
        %v581 = vsel %vm578, %v580, %v576
        %v582 = vmul.f32 1.0, %v581
        %v583 = vmul.f32 %v498, %v537
        %v584 = vmul.f32 %v500, %v552
        %v585 = vmul.f32 %v503, %v567
        %v586 = vmul.f32 %v505, %v582
        %587 = vst [vmem:[%s409] sm:$0xff] %v583
        %588 = vst [vmem:[%s409 + $0x8] sm:$0xff] %v584
        %589 = vst [vmem:[%s409 + $0x10] sm:$0xff] %v585
        %590 = vst [vmem:[%s409 + $0x18] sm:$0xff] %v586
        %v591 = vld [vmem:[%s4] sm:$0xf]
        %v592 = vld [vmem:[%s4 + $0x4] sm:$0xf]
        %v593 = vld [vmem:[%s431] sm:$0xf]
        %v594 = vld [vmem:[%s5] sm:$0xff]
        %v595 = vld [vmem:[%s5 + $0x8] sm:$0xff]
        %597 = vset.pattern.permute.xlu0 0
        %598 = vperm.xlu0 %597, %v594
        %v599 = vpop.permute.xlu0 %598
        %602 = vset.pattern.permute.xlu0 0
        %603 = vperm.xlu0 %602, %v595
        %v604 = vpop.permute.xlu0 %603
        %v608 = vunpack.c.l.b16 %v591
        %v609 = vunpack.c.l.b16 %v592
        %v610 = vpack.c.b16 %v609, %v608
        %v612 = vsel %vm477, %v610, 0
        %v615 = vsel %vm484, %v593, 0
        %617 = vmatpush.bf16.msra.mxu0 0
        %618 = vmatpush.bf16.msra.mxu0 0
        %619 = vmatpush.bf16.msra.mxu0 0
        %620 = vmatpush.bf16.msra.mxu0 0
        %621 = vmatpush.bf16.msra.mxu0 0
        %622 = vmatpush.bf16.msra.mxu0 0
        %623 = vmatpush.bf16.msra.mxu0 0
        %624 = vmatpush.bf16.msra.mxu0 %v615
        %625 = vmatmul.bf16.gmra.mxu0 %v612
        %v626 = vpop.f32.mrf.mxu0
        %v627 = vadd.f32 %v599, %v626
        %v628 = vpop.f32.mrf.mxu0
        %v629 = vadd.f32 %v604, %v628
        %630 = vdwg.mxu0
        %v631 = vxor.u32 %v627, 2147483648
        %v632 = vxor.u32 %v629, 2147483648
        %v633 = vmul.f32 %v631, 1.442695
        %v634 = vpow.pop %v633
        %v635 = vmul.f32 %v632, 1.442695
        %v636 = vpow.pop %v635
        %v637 = vadd.f32 %v634, 1.0
        %v638 = vadd.f32 %v636, 1.0
        %v639 = vrcp.pop %v637
        %v640 = vmul.f32 %v637, %v639
        %v641 = vsub.f32 1.0, %v640
        %v642 = vmul.f32 %v639, %v641
        %v643 = vadd.f32 %v639, %v642
        %vm644 = vweird.f32 %v637
        %vm645 = vweird.f32 %v639
        %vm646 = vmor %vm644, %vm645
        %v647 = vsel %vm646, %v639, %v643
        %v648 = vand.u32 2147483647, %v637
        %vm649 = vcmp.eq.f32.partialorder %v648, 8.507059e+37
        %v650 = vand.u32 %v637, 2147483648
        %v651 = vor.u32 1.1754944e-38, %v650
        %v652 = vsel %vm649, %v651, %v647
        %v653 = vmul.f32 1.0, %v652
        %v654 = vrcp.pop %v638
        %v655 = vmul.f32 %v638, %v654
        %v656 = vsub.f32 1.0, %v655
        %v657 = vmul.f32 %v654, %v656
        %v658 = vadd.f32 %v654, %v657
        %vm659 = vweird.f32 %v638
        %vm660 = vweird.f32 %v654
        %vm661 = vmor %vm659, %vm660
        %v662 = vsel %vm661, %v654, %v658
        %v663 = vand.u32 2147483647, %v638
        %vm664 = vcmp.eq.f32.partialorder %v663, 8.507059e+37
        %v665 = vand.u32 %v638, 2147483648
        %v666 = vor.u32 1.1754944e-38, %v665
        %v667 = vsel %vm664, %v666, %v662
        %v668 = vmul.f32 1.0, %v667
        %v669 = vmul.f32 %v627, %v653
        %v670 = vmul.f32 %v629, %v668
        %671 = vst [vmem:[%s416] sm:$0xff] %v669
        %672 = vst [vmem:[%s416 + $0x8] sm:$0xff] %v670
        %v673 = vld [vmem:[%s7] sm:$0xf]
        %v674 = vld [vmem:[%s436] sm:$0xff]
        %v675 = vld [vmem:[%s8] sm:$0xff]
        %677 = vset.pattern.permute.xlu0 0
        %678 = vperm.xlu0 %677, %v675
        %v679 = vpop.permute.xlu0 %678
        %v682 = vunpack.c.l.b16 %v674
        %v683 = vunpack.c.h.b16 %v674
        %v684 = vpack.c.b16 %v682, %v682
        %v685 = vpack.c.b16 %v683, %v683
        %v687 = vsel %vm477, %v673, 0
        %v690 = vsel %vm484, %v684, 0
        %v693 = vsel %vm484, %v685, 0
        %695 = vmatpush.bf16.msra.mxu0 0
        %696 = vmatpush.bf16.msra.mxu0 0
        %697 = vmatpush.bf16.msra.mxu0 0
        %698 = vmatpush.bf16.msra.mxu0 0
        %699 = vmatpush.bf16.msra.mxu0 0
        %700 = vmatpush.bf16.msra.mxu0 0
        %701 = vmatpush.bf16.msra.mxu0 0
        %702 = vmatpush.bf16.msra.mxu0 %v690
        %703 = vmatmul.bf16.gmra.mxu0 %v687
        %v704 = vpop.f32.mrf.mxu0
        %v705 = vadd.f32 %v679, %v704
        %v706 = vpop.f32.mrf.mxu0
        %707 = vdwg.mxu0
        %708 = vmatpush.bf16.msra.mxu0 0
        %709 = vmatpush.bf16.msra.mxu0 0
        %710 = vmatpush.bf16.msra.mxu0 0
        %711 = vmatpush.bf16.msra.mxu0 0
        %712 = vmatpush.bf16.msra.mxu0 0
        %713 = vmatpush.bf16.msra.mxu0 0
        %714 = vmatpush.bf16.msra.mxu0 0
        %715 = vmatpush.bf16.msra.mxu0 %v693
        %716 = vmatmul.bf16.gmra.mxu0 %v687
        %v717 = vpop.f32.mrf.mxu0
        %v718 = vadd.f32 %v679, %v717
        %v719 = vpop.f32.mrf.mxu0
        %720 = vdwg.mxu0
        %v721 = vxor.u32 %v705, 2147483648
        %v722 = vxor.u32 %v718, 2147483648
        %v723 = vmul.f32 %v721, 1.442695
        %v724 = vpow.pop %v723
        %v725 = vmul.f32 %v722, 1.442695
        %v726 = vpow.pop %v725
        %v727 = vadd.f32 %v724, 1.0
        %v728 = vadd.f32 %v726, 1.0
        %v729 = vrcp.pop %v727
        %v730 = vmul.f32 %v727, %v729
        %v731 = vsub.f32 1.0, %v730
        %v732 = vmul.f32 %v729, %v731
        %v733 = vadd.f32 %v729, %v732
        %vm734 = vweird.f32 %v727
        %vm735 = vweird.f32 %v729
        %vm736 = vmor %vm734, %vm735
        %v737 = vsel %vm736, %v729, %v733
        %v738 = vand.u32 2147483647, %v727
        %vm739 = vcmp.eq.f32.partialorder %v738, 8.507059e+37
        %v740 = vand.u32 %v727, 2147483648
        %v741 = vor.u32 1.1754944e-38, %v740
        %v742 = vsel %vm739, %v741, %v737
        %v743 = vmul.f32 1.0, %v742
        %v744 = vrcp.pop %v728
        %v745 = vmul.f32 %v728, %v744
        %v746 = vsub.f32 1.0, %v745
        %v747 = vmul.f32 %v744, %v746
        %v748 = vadd.f32 %v744, %v747
        %vm749 = vweird.f32 %v728
        %vm750 = vweird.f32 %v744
        %vm751 = vmor %vm749, %vm750
        %v752 = vsel %vm751, %v744, %v748
        %v753 = vand.u32 2147483647, %v728
        %vm754 = vcmp.eq.f32.partialorder %v753, 8.507059e+37
        %v755 = vand.u32 %v728, 2147483648
        %v756 = vor.u32 1.1754944e-38, %v755
        %v757 = vsel %vm754, %v756, %v752
        %v758 = vmul.f32 1.0, %v757
        %v759 = vmul.f32 %v705, %v743
        %v760 = vmul.f32 %v718, %v758
        %761 = vst [vmem:[%s423] sm:$0xff] %v759
        %762 = vst [vmem:[%s423 + $0x8] sm:$0xff] %v760
        %s763 = sand.u32 %s241, 1
        %s764 = scalar_lea.sflag [#allocation3], %s763
        %s765 = sand.u32 %s241, 1
        %s766 = smul.addr %s765, 32
        %s767 = scalar_lea.vmem [#allocation2], %s766
        %s768 = sand.u32 %s29, 1
        %s769 = scalar_lea.sflag [#allocation5], %s768
        %s770 = sand.u32 %s267, 1
        %s771 = smul.addr %s770, 16
        %s772 = scalar_lea.vmem [#allocation4], %s771
        %s773 = sand.u32 %s29, 1
        %s774 = scalar_lea.sflag [#allocation5], %s773
        %s775 = sand.u32 %s293, 1
        %s776 = smul.addr %s775, 16
        %s777 = scalar_lea.vmem [#allocation6], %s776
        // Predicated region
        $region57: #{tpu_custom_call.1} parent=55 // pred_check
          %p778 = pneg %p251
        $region58: #{tpu_custom_call.1} parent=55 // pred_check_branch
          %780 = sbr.rel (%p778) target = $region60
        $region59: #{tpu_custom_call.1} parent=55 // pred_region
          %782 = vsyncadd %s764, 0
          %s783 = smul.addr %s29, 4
          %s784 = smul.addr %s783, 8
          %s785 = scalar_lea.hbm %s9, %s784
          %s786 = sshll.u32 %s767, 4
          %s787 = int_to_ptr.vmem [resolvable:$true] %s786
          %s788 = sshll.u32 %s785, 4
          %s789 = int_to_ptr.hbm [resolvable:$true] %s788
          %794 = dma.vmem_to_hbm [thread:$0]  %s787, 512, %s789, %s764, 128, 128, 8
        $region60: #{tpu_custom_call.1} parent=55 // pred_fallthru
          _
        // Predicated region
        $region61: #{tpu_custom_call.1} parent=55 // pred_check
          %p795 = pneg %p277
        $region62: #{tpu_custom_call.1} parent=55 // pred_check_branch
          %797 = sbr.rel (%p795) target = $region64
        $region63: #{tpu_custom_call.1} parent=55 // pred_region
          %799 = vsyncadd %s769, 0
          %s800 = smul.addr %s29, 2
          %s801 = smul.addr %s800, 8
          %s802 = scalar_lea.hbm %s10, %s801
          %s803 = sshll.u32 %s772, 4
          %s804 = int_to_ptr.vmem [resolvable:$true] %s803
          %s805 = sshll.u32 %s802, 4
          %s806 = int_to_ptr.hbm [resolvable:$true] %s805
          %811 = dma.vmem_to_hbm [thread:$0]  %s804, 256, %s806, %s769, 128, 128, 8
        $region64: #{tpu_custom_call.1} parent=55 // pred_fallthru
          _
        // Predicated region
        $region65: #{tpu_custom_call.1} parent=55 // pred_check
          %p812 = pneg %p303
        $region66: #{tpu_custom_call.1} parent=55 // pred_check_branch
          %814 = sbr.rel (%p812) target = $region68
        $region67: #{tpu_custom_call.1} parent=55 // pred_region
          %816 = vsyncadd %s774, 0
          %s817 = smul.addr %s29, 2
          %s818 = smul.addr %s817, 8
          %s819 = scalar_lea.hbm %s11, %s818
          %s821 = sshll.u32 %s777, 4
          %s822 = int_to_ptr.vmem [resolvable:$true] %s821
          %s823 = sshll.u32 %s819, 4
          %s824 = int_to_ptr.hbm [resolvable:$true] %s823
          %826 = dma.vmem_to_hbm [thread:$0]  %s822, 256, %s824, %s774
        $region68: #{tpu_custom_call.1} parent=55 // pred_fallthru
          _
      $region56: #{tpu_custom_call.1} parent=5 // pred_fallthru
        _
      %p827 = scmp.le.s32.totalorder 2, %s24
      // Predicated region
      $region69: #{tpu_custom_call.1} parent=5 // pred_check
        %p828 = pneg %p827
      $region70: #{tpu_custom_call.1} parent=5 // pred_check_branch
        %830 = sbr.rel (%p828) target = $region72
      $region71: #{tpu_custom_call.1} parent=5 // pred_region
        %s831 = ssub.s32 %s24, 2
        // Predicated region
        $region73: #{tpu_custom_call.1} parent=71 // pred_check
          %p832 = pneg %p257
        $region74: #{tpu_custom_call.1} parent=71 // pred_check_branch
          %834 = sbr.rel (%p832) target = $region76
        $region75: #{tpu_custom_call.1} parent=71 // pred_region
          %s835 = sand.u32 %s242, 1
          %s836 = scalar_lea.sflag [#allocation3], %s835
          %s837 = sand.u32 %s242, 1
          %s838 = smul.addr %s837, 32
          %s839 = scalar_lea.vmem [#allocation2], %s838
          %841 = dma.done %s836, 512
        $region76: #{tpu_custom_call.1} parent=71 // pred_fallthru
          _
        // Predicated region
        $region77: #{tpu_custom_call.1} parent=71 // pred_check
          %p842 = pneg %p283
        $region78: #{tpu_custom_call.1} parent=71 // pred_check_branch
          %844 = sbr.rel (%p842) target = $region80
        $region79: #{tpu_custom_call.1} parent=71 // pred_region
          %s845 = sand.u32 %s30, 1
          %s846 = scalar_lea.sflag [#allocation5], %s845
          %s847 = sand.u32 %s268, 1
          %s848 = smul.addr %s847, 16
          %s849 = scalar_lea.vmem [#allocation4], %s848
          %851 = dma.done %s846, 256
        $region80: #{tpu_custom_call.1} parent=71 // pred_fallthru
          _
        // Predicated region
        $region81: #{tpu_custom_call.1} parent=71 // pred_check
          %p852 = pneg %p309
        $region82: #{tpu_custom_call.1} parent=71 // pred_check_branch
          %854 = sbr.rel (%p852) target = $region84
        $region83: #{tpu_custom_call.1} parent=71 // pred_region
          %s855 = sand.u32 %s30, 1
          %s856 = scalar_lea.sflag [#allocation5], %s855
          %s857 = sand.u32 %s294, 1
          %s858 = smul.addr %s857, 16
          %s859 = scalar_lea.vmem [#allocation6], %s858
          %861 = dma.done %s856, 256
        $region84: #{tpu_custom_call.1} parent=71 // pred_fallthru
          _
      $region72: #{tpu_custom_call.1} parent=5 // pred_fallthru
        _
    $region6: #{tpu_custom_call.1} parent=1 // loop_footer
      %s28 = sadd.s32 1, %s24
    $region7: #{tpu_custom_call.1} parent=1 // loop_footer_branch
      %23 = sbr.rel target = $region3
    $region8: #{tpu_custom_call.1} parent=1 // loop_exit
      _
    %862 = vsyncpa [#allocation3], 1
    %s863 = scalar_lea.sflag [#allocation3], 1
    %864 = vsyncpa %s863, 1
    %865 = vsyncpa [#allocation5], 1
    %s866 = scalar_lea.sflag [#allocation5], 1
    %867 = vsyncpa %s866, 1

</llo_original>
